<compile_context>
chip_gen: v6e
topology: v6e:2x2x1
jax: 0.10.0
libtpu: 0.0.40
codegen_flags: <defaults>
</compile_context>

<pallas_src>
import functools

import jax
import jax.numpy as jnp
from jax.experimental import pallas as pl
from jax.experimental.pallas import tpu as pltpu

_BF16 = jnp.bfloat16
_F32 = jnp.float32
_TL_VMEM_BUDGET = 40 * 1024 * 1024   # headroom under v7x's 64 MiB physical VMEM


# ----------------------------- Pallas kernel --------------------------------
def _fused_encoder_kernel(xc_ref, xh_ref, w1g_ref, b1_ref, w2_ref, b2_ref,
                          o_ref, y1_ref, xt_ref, *, A, K2, halo, tl):
    """One (lane-tile, batch) grid step of Conv1d->ReLU->Conv1d->ReLU.

    xc_ref : (1, SC, TL)      bf16  current phase-split input tile (lanes = time)
    xh_ref : (1, SC, 128)     bf16  first 128 columns of the next tile (only `halo` used)
    w1g_ref: (A, Cmid, SC)    bf16  conv1 taps grouped by phase offset a = k // stride
    b1_ref : (Cmid, 1)        f32
    w2_ref : (K2, Cout, Cmid) bf16
    b2_ref : (Cout, 1)        f32
    o_ref  : (1, Cout, TL)    f32   lane-dense output tile
    y1_ref : (Cmid, TL+128)   bf16  VMEM scratch for the intermediate activation
    xt_ref : (SC, 128)        bf16  VMEM scratch for the boundary (halo) window
    """
    n1 = tl + K2 - 1            # y1 columns needed for tl output columns
    tl_int = tl - (A - 1)       # y1 columns computable from the current tile alone

    # ---- conv1 interior (columns [0, tl_int)) straight from the input block ----
    acc1 = jnp.dot(w1g_ref[0], xc_ref[0, :, 0:tl_int], preferred_element_type=_F32)
    for a in range(1, A):
        acc1 += jnp.dot(w1g_ref[a], xc_ref[0, :, a:a + tl_int],
                        preferred_element_type=_F32)
    y1_ref[:, 0:tl_int] = jnp.maximum(acc1 + b1_ref[...], 0.0).astype(y1_ref.dtype)

    # ---- conv1 tail: the `halo` columns that straddle the tile boundary ----
    if halo > 0:
        if A > 1:
            xt_ref[:, 0:A - 1] = xc_ref[0, :, tl_int:tl]
        xt_ref[:, A - 1:A - 1 + halo] = xh_ref[0, :, 0:halo]
        acc1t = jnp.dot(w1g_ref[0], xt_ref[:, 0:halo], preferred_element_type=_F32)
        for a in range(1, A):
            acc1t += jnp.dot(w1g_ref[a], xt_ref[:, a:a + halo],
                             preferred_element_type=_F32)
        y1_ref[:, tl_int:n1] = jnp.maximum(acc1t + b1_ref[...], 0.0).astype(y1_ref.dtype)

    # ---- conv2 (stride 1) + bias + ReLU ----
    acc2 = jnp.dot(w2_ref[0], y1_ref[:, 0:tl], preferred_element_type=_F32)
    for k in range(1, K2):
        acc2 += jnp.dot(w2_ref[k], y1_ref[:, k:k + tl], preferred_element_type=_F32)
    o_ref[0] = jnp.maximum(acc2 + b2_ref[...], 0.0).astype(o_ref.dtype)


# ------------------------------- wrapper -------------------------------------
def _vmem_estimate_bytes(tl, SC, Cmid, Cout, A, K2):
    io = 2 * (SC * tl * 2 + SC * 128 * 2 + Cout * tl * 4)              # double-buffered blocks
    wt = 2 * (A * Cmid * SC * 2 + K2 * Cout * Cmid * 2 + (Cmid + Cout) * 4)
    sc = Cmid * (tl + 128) * 2 + SC * 128 * 2                          # kernel scratch
    return io + wt + sc


def _fused_conv_relu_conv_relu(x_ncl, w1, b1, w2, b2, stride):
    """x_ncl: (B, Cin, L) NCL (PyTorch layout). Returns (B, Cout, L2) NCL, f32."""
    B, Cin, L = x_ncl.shape
    Cmid, _, K1 = w1.shape
    Cout, _, K2 = w2.shape
    s = int(stride)

    Lout1 = (L - K1) // s + 1              # after conv1 (valid, stride s)
    L2 = Lout1 - K2 + 1                    # after conv2 (valid, stride 1)
    assert L2 >= 1, "input too short for the two valid convolutions"

    A = pl.cdiv(K1, s)                     # conv1 tap groups (phase offsets)
    halo = K2 + A - 2                      # boundary columns needed from the next tile
    assert A - 1 + halo <= 128, "kernel sizes this large need a wider halo block"

    # pad sublane-ish dims to multiples of 8 (clean vreg layouts, no masked sublanes)
    SC0 = s * Cin
    SC = 8 * pl.cdiv(SC0, 8)
    Cmid_p = 8 * pl.cdiv(Cmid, 8)
    Cout_p = 8 * pl.cdiv(Cout, 8)

    # output lane tile: largest of 1024/512/256/128 that fits the VMEM budget
    TL_full = 128 * pl.cdiv(L2, 128)
    TL = min(128, TL_full)
    for cand in (1024, 512, 256):
        t = min(cand, TL_full)
        if _vmem_estimate_bytes(t, SC, Cmid_p, Cout_p, A, K2) <= _TL_VMEM_BUDGET:
            TL = t
            break
    assert TL > A - 1
    NT = pl.cdiv(L2, TL)

    # ---- host: single-pass phase split of x (bf16 cast folded into this pass) ----
    Lq = pl.cdiv(L, s)                                   # natural per-phase length
    Lq_pad = max(NT * TL + 128, 128 * pl.cdiv(Lq, 128))  # 128-wide halo block must exist
    xpad = jnp.pad(x_ncl, ((0, 0), (0, 0), (0, s * Lq_pad - L))).astype(_BF16)
    xp = (xpad.reshape(B, Cin, Lq_pad, s)
              .transpose(0, 3, 1, 2)                     # (B, s, Cin, Lq_pad)
              .reshape(B, SC0, Lq_pad))                  # xp[b, r*Cin+ci, q] = x[b, ci, s*q+r]
    if SC > SC0:
        xp = jnp.pad(xp, ((0, 0), (0, SC - SC0), (0, 0)))

    # ---- weights: W1g[a, c1, r*Cin+ci] = w1[c1, ci, s*a+r] (zero past K1 / pads) ----
    w1p = jnp.pad(w1, ((0, 0), (0, 0), (0, A * s - K1)))
    w1g = (w1p.reshape(Cmid, Cin, A, s)
              .transpose(2, 0, 3, 1)
              .reshape(A, Cmid, SC0))
    w1g = jnp.pad(w1g, ((0, 0), (0, Cmid_p - Cmid), (0, SC - SC0))).astype(_BF16)
    w2t = jnp.transpose(w2, (2, 0, 1))                   # (K2, Cout, Cmid)
    w2t = jnp.pad(w2t, ((0, 0), (0, Cout_p - Cout), (0, Cmid_p - Cmid))).astype(_BF16)
    b1c = jnp.pad(b1, (0, Cmid_p - Cmid)).astype(_F32).reshape(Cmid_p, 1)
    b2c = jnp.pad(b2, (0, Cout_p - Cout)).astype(_F32).reshape(Cout_p, 1)

    kernel = functools.partial(_fused_encoder_kernel, A=A, K2=K2, halo=halo, tl=TL)
    vmem_limit = int(min(64 * 2**20,
                         max(32 * 2**20,
                             2 * _vmem_estimate_bytes(TL, SC, Cmid_p, Cout_p, A, K2))))
    hb = TL // 128   # halo block-index stride (halo block is 128 lanes wide)

    out = pl.pallas_call(
        kernel,
        out_shape=jax.ShapeDtypeStruct((B, Cout_p, NT * TL), _F32),
        grid_spec=pltpu.PrefetchScalarGridSpec(
            num_scalar_prefetch=0,
            grid=(NT, B),                                  # long axis first (v7x 2-TC split)
            in_specs=[
                pl.BlockSpec((1, SC, TL), lambda j, b: (b, 0, j)),              # current tile
                pl.BlockSpec((1, SC, 128), lambda j, b: (b, 0, (j + 1) * hb)),  # 128-wide halo
                pl.BlockSpec((A, Cmid_p, SC), lambda j, b: (0, 0, 0)),
                pl.BlockSpec((Cmid_p, 1), lambda j, b: (0, 0)),
                pl.BlockSpec((K2, Cout_p, Cmid_p), lambda j, b: (0, 0, 0)),
                pl.BlockSpec((Cout_p, 1), lambda j, b: (0, 0)),
            ],
            out_specs=pl.BlockSpec((1, Cout_p, TL), lambda j, b: (b, 0, j)),
            scratch_shapes=[
                pltpu.VMEM((Cmid_p, TL + 128), _BF16),     # y1 (intermediate) stage
                pltpu.VMEM((SC, 128), _BF16),              # boundary window
            ],
        ),
        compiler_params=pltpu.CompilerParams(
            dimension_semantics=("parallel", "parallel"),
            vmem_limit_bytes=vmem_limit,
        ),
    )(xp, xp, w1g, b1c, w2t, b2c)

    return out[:, :Cout, :L2]


# ----------------------------- EncoderBlock ---------------------------------
def init_encoder_block_params(key, chin, chout, kernel_size):
    """Deterministic init mimicking PyTorch Conv1d default (uniform +-1/sqrt(fan_in))."""
    k1, k2, k3, k4 = jax.random.split(key, 4)
    bound1 = 1.0 / jnp.sqrt(chin * kernel_size)
    bound2 = 1.0 / jnp.sqrt(chout * kernel_size)
    return {
        "w1": jax.random.uniform(k1, (chout, chin, kernel_size), jnp.float32,
                                 -bound1, bound1),
        "b1": jax.random.uniform(k2, (chout,), jnp.float32, -bound1, bound1),
        "w2": jax.random.uniform(k3, (chout, chout, kernel_size), jnp.float32,
                                 -bound2, bound2),
        "b2": jax.random.uniform(k4, (chout,), jnp.float32, -bound2, bound2),
    }


@functools.partial(jax.jit, static_argnames=("stride",))
def encoder_block_forward(params, x_ncl, stride):
    """x_ncl: (B, Cin, L) NCL (PyTorch layout). Returns (B, Cout, L2) NCL."""
    return _fused_conv_relu_conv_relu(x_ncl, params["w1"], params["b1"],
                                      params["w2"], params["b2"], stride)


# pure-JAX reference (no Pallas) for a sanity check
def _ref_forward(params, x_ncl, stride):
    def conv1d(x, w, b, s):
        y = jax.lax.conv_general_dilated(
            x, w, window_strides=(s,), padding="VALID",
            dimension_numbers=("NCH", "OIH", "NCH"),
            precision=jax.lax.Precision.HIGHEST)
        return jax.nn.relu(y + b[None, :, None])
    y = conv1d(x_ncl, params["w1"], params["b1"], stride)
    return conv1d(y, params["w2"], params["b2"], 1)


if __name__ == "__main__":
    key = jax.random.PRNGKey(0)

    configs = [
        # (B, chin, chout, K, stride, L)
        (2, 4, 8, 3, 2, 64),       # tiny: single lane tile
        (2, 4, 8, 3, 2, 2200),     # two lane tiles -> exercises the 128-wide halo path
        (2, 3, 5, 3, 1, 200),      # stride-1 path, odd (padded) channel counts
    ]
    for (B, chin, chout, K, stride, L) in configs:
        key, kp, kx = jax.random.split(key, 3)
        params = init_encoder_block_params(kp, chin, chout, K)
        x = jax.random.normal(kx, (B, chin, L), dtype=jnp.float32)   # NCL like PyTorch

        out = jax.block_until_ready(encoder_block_forward(params, x, stride))

        # Tight check vs a reference fed the same bf16-rounded inputs/weights
        # (isolates the intended bf16 precision choice from kernel-algebra bugs).
        qparams = {k: v.astype(jnp.bfloat16).astype(jnp.float32)
                   for k, v in params.items()}
        xq = x.astype(jnp.bfloat16).astype(jnp.float32)
        ref_q = _ref_forward(qparams, xq, stride)
        # Loose check vs the exact f32 PyTorch semantics (bf16 tolerance).
        ref = _ref_forward(params, x, stride)

        assert out.shape == ref.shape, (out.shape, ref.shape)
        err_q = float(jnp.max(jnp.abs(out - ref_q)))
        err_f = float(jnp.max(jnp.abs(out - ref)))
        assert jnp.allclose(out, ref_q, atol=3e-2, rtol=3e-2), (
            f"mismatch vs bf16-rounded reference (max abs err {err_q}) for cfg "
            f"{(B, chin, chout, K, stride, L)}")
        assert jnp.allclose(out, ref, atol=1e-1, rtol=1e-1), (
            f"mismatch vs f32 reference (max abs err {err_f}) for cfg "
            f"{(B, chin, chout, K, stride, L)}")

    print("KERNEL_OK")
</pallas_src>

<mosaic_0001>
module attributes {stable_mosaic.version = 11 : i64} {
  func.func @_fused_encoder_kernel(%arg0: i32, %arg1: i32, %arg2: memref<1x8x128xbf16, #tpu.memory_space<vmem>>, %arg3: memref<1x8x128xbf16, #tpu.memory_space<vmem>>, %arg4: memref<2x8x8xbf16, #tpu.memory_space<vmem>>, %arg5: memref<8x1xf32, #tpu.memory_space<vmem>>, %arg6: memref<3x8x8xbf16, #tpu.memory_space<vmem>>, %arg7: memref<8x1xf32, #tpu.memory_space<vmem>>, %arg8: memref<1x8x128xf32, #tpu.memory_space<vmem>>, %arg9: memref<8x256xbf16, #tpu.memory_space<vmem>>, %arg10: memref<8x128xbf16, #tpu.memory_space<vmem>>) attributes {dimension_semantics = [#tpu.dimension_semantics<parallel>, #tpu.dimension_semantics<parallel>], iteration_bounds = array<i64: 1, 2>, scalar_prefetch = 0 : i64, scratch_operands = 2 : i64, tpu.core_type = #tpu.core_type<tc>, window_params = [{transform_indices = @transform_0, window_bounds = array<i64: 1, 8, 128>}, {transform_indices = @transform_1, window_bounds = array<i64: 1, 8, 128>}, {pipeline_mode = #tpu.pipeline_mode<synchronous>, transform_indices = @transform_2, window_bounds = array<i64: 2, 8, 8>}, {pipeline_mode = #tpu.pipeline_mode<synchronous>, transform_indices = @transform_3, window_bounds = array<i64: 8, 1>}, {pipeline_mode = #tpu.pipeline_mode<synchronous>, transform_indices = @transform_4, window_bounds = array<i64: 3, 8, 8>}, {pipeline_mode = #tpu.pipeline_mode<synchronous>, transform_indices = @transform_5, window_bounds = array<i64: 8, 1>}, {transform_indices = @transform_6, window_bounds = array<i64: 1, 8, 128>}]} {
    %c0 = arith.constant 0 : index
    %c0_0 = arith.constant 0 : index
    %c0_1 = arith.constant 0 : index
    %0 = vector.load %arg4[%c0, %c0_0, %c0_1] : memref<2x8x8xbf16, #tpu.memory_space<vmem>>, vector<1x8x8xbf16>
    %1 = vector.shape_cast %0 : vector<1x8x8xbf16> to vector<8x8xbf16>
    %c0_2 = arith.constant 0 : index
    %c0_3 = arith.constant 0 : index
    %c0_4 = arith.constant 0 : index
    %2 = vector.load %arg2[%c0_2, %c0_3, %c0_4] : memref<1x8x128xbf16, #tpu.memory_space<vmem>>, vector<1x8x127xbf16>
    %3 = vector.shape_cast %2 : vector<1x8x127xbf16> to vector<8x127xbf16>
    %cst = arith.constant dense<0.000000e+00> : vector<8x127xf32>
    %4 = tpu.matmul %1, %3, %cst {dimension_numbers = #tpu.dot_dimension_numbers<[1], [0], [0], [1], [0, 0, 1, 1], [], []>} : vector<8x8xbf16>, vector<8x127xbf16>, vector<8x127xf32> -> vector<8x127xf32>
    %c1 = arith.constant 1 : index
    %c0_5 = arith.constant 0 : index
    %c0_6 = arith.constant 0 : index
    %5 = vector.load %arg4[%c1, %c0_5, %c0_6] : memref<2x8x8xbf16, #tpu.memory_space<vmem>>, vector<1x8x8xbf16>
    %6 = vector.shape_cast %5 : vector<1x8x8xbf16> to vector<8x8xbf16>
    %c0_7 = arith.constant 0 : index
    %c0_8 = arith.constant 0 : index
    %c1_9 = arith.constant 1 : index
    %7 = vector.load %arg2[%c0_7, %c0_8, %c1_9] : memref<1x8x128xbf16, #tpu.memory_space<vmem>>, vector<1x8x127xbf16>
    %8 = vector.shape_cast %7 : vector<1x8x127xbf16> to vector<8x127xbf16>
    %cst_10 = arith.constant dense<0.000000e+00> : vector<8x127xf32>
    %9 = tpu.matmul %6, %8, %cst_10 {dimension_numbers = #tpu.dot_dimension_numbers<[1], [0], [0], [1], [0, 0, 1, 1], [], []>} : vector<8x8xbf16>, vector<8x127xbf16>, vector<8x127xf32> -> vector<8x127xf32>
    %10 = arith.addf %4, %9 : vector<8x127xf32>
    %c0_11 = arith.constant 0 : index
    %c0_12 = arith.constant 0 : index
    %11 = vector.load %arg5[%c0_11, %c0_12] : memref<8x1xf32, #tpu.memory_space<vmem>>, vector<8x1xf32>
    %12 = vector.broadcast %11 : vector<8x1xf32> to vector<8x127xf32>
    %13 = arith.addf %10, %12 : vector<8x127xf32>
    %cst_13 = arith.constant 0.000000e+00 : f32
    %14 = vector.broadcast %cst_13 : f32 to vector<8x127xf32>
    %15 = arith.maximumf %13, %14 : vector<8x127xf32>
    %16 = arith.truncf %15 : vector<8x127xf32> to vector<8x127xbf16>
    %c0_14 = arith.constant 0 : index
    %c0_15 = arith.constant 0 : index
    %17 = vector.load %arg9[%c0_14, %c0_15] : memref<8x256xbf16, #tpu.memory_space<vmem>>, vector<8x127xbf16>
    tpu.vector_store %arg9[%c0_14, %c0_15], %16 {strides = array<i32>} : memref<8x256xbf16, #tpu.memory_space<vmem>>, vector<8x127xbf16>,
    %c0_16 = arith.constant 0 : index
    %c0_17 = arith.constant 0 : index
    %c127 = arith.constant 127 : index
    %18 = vector.load %arg2[%c0_16, %c0_17, %c127] : memref<1x8x128xbf16, #tpu.memory_space<vmem>>, vector<1x8x1xbf16>
    %19 = vector.shape_cast %18 : vector<1x8x1xbf16> to vector<8x1xbf16>
    %c0_18 = arith.constant 0 : index
    %c0_19 = arith.constant 0 : index
    %20 = vector.load %arg10[%c0_18, %c0_19] : memref<8x128xbf16, #tpu.memory_space<vmem>>, vector<8x1xbf16>
    tpu.vector_store %arg10[%c0_18, %c0_19], %19 {strides = array<i32>} : memref<8x128xbf16, #tpu.memory_space<vmem>>, vector<8x1xbf16>,
    %c0_20 = arith.constant 0 : index
    %c0_21 = arith.constant 0 : index
    %c0_22 = arith.constant 0 : index
    %21 = vector.load %arg3[%c0_20, %c0_21, %c0_22] : memref<1x8x128xbf16, #tpu.memory_space<vmem>>, vector<1x8x3xbf16>
    %22 = vector.shape_cast %21 : vector<1x8x3xbf16> to vector<8x3xbf16>
    %c0_23 = arith.constant 0 : index
    %c1_24 = arith.constant 1 : index
    %23 = vector.load %arg10[%c0_23, %c1_24] : memref<8x128xbf16, #tpu.memory_space<vmem>>, vector<8x3xbf16>
    tpu.vector_store %arg10[%c0_23, %c1_24], %22 {strides = array<i32>} : memref<8x128xbf16, #tpu.memory_space<vmem>>, vector<8x3xbf16>,
    %c0_25 = arith.constant 0 : index
    %c0_26 = arith.constant 0 : index
    %c0_27 = arith.constant 0 : index
    %24 = vector.load %arg4[%c0_25, %c0_26, %c0_27] : memref<2x8x8xbf16, #tpu.memory_space<vmem>>, vector<1x8x8xbf16>
    %25 = vector.shape_cast %24 : vector<1x8x8xbf16> to vector<8x8xbf16>
    %c0_28 = arith.constant 0 : index
    %c0_29 = arith.constant 0 : index
    %26 = vector.load %arg10[%c0_28, %c0_29] : memref<8x128xbf16, #tpu.memory_space<vmem>>, vector<8x3xbf16>
    %cst_30 = arith.constant dense<0.000000e+00> : vector<8x3xf32>
    %27 = tpu.matmul %25, %26, %cst_30 {dimension_numbers = #tpu.dot_dimension_numbers<[1], [0], [0], [1], [0, 0, 1, 1], [], []>} : vector<8x8xbf16>, vector<8x3xbf16>, vector<8x3xf32> -> vector<8x3xf32>
    %c1_31 = arith.constant 1 : index
    %c0_32 = arith.constant 0 : index
    %c0_33 = arith.constant 0 : index
    %28 = vector.load %arg4[%c1_31, %c0_32, %c0_33] : memref<2x8x8xbf16, #tpu.memory_space<vmem>>, vector<1x8x8xbf16>
    %29 = vector.shape_cast %28 : vector<1x8x8xbf16> to vector<8x8xbf16>
    %c0_34 = arith.constant 0 : index
    %c1_35 = arith.constant 1 : index
    %30 = vector.load %arg10[%c0_34, %c1_35] : memref<8x128xbf16, #tpu.memory_space<vmem>>, vector<8x3xbf16>
    %cst_36 = arith.constant dense<0.000000e+00> : vector<8x3xf32>
    %31 = tpu.matmul %29, %30, %cst_36 {dimension_numbers = #tpu.dot_dimension_numbers<[1], [0], [0], [1], [0, 0, 1, 1], [], []>} : vector<8x8xbf16>, vector<8x3xbf16>, vector<8x3xf32> -> vector<8x3xf32>
    %32 = arith.addf %27, %31 : vector<8x3xf32>
    %c0_37 = arith.constant 0 : index
    %c0_38 = arith.constant 0 : index
    %33 = vector.load %arg5[%c0_37, %c0_38] : memref<8x1xf32, #tpu.memory_space<vmem>>, vector<8x1xf32>
    %34 = vector.broadcast %33 : vector<8x1xf32> to vector<8x3xf32>
    %35 = arith.addf %32, %34 : vector<8x3xf32>
    %cst_39 = arith.constant 0.000000e+00 : f32
    %36 = vector.broadcast %cst_39 : f32 to vector<8x3xf32>
    %37 = arith.maximumf %35, %36 : vector<8x3xf32>
    %38 = arith.truncf %37 : vector<8x3xf32> to vector<8x3xbf16>
    %c0_40 = arith.constant 0 : index
    %c127_41 = arith.constant 127 : index
    %39 = vector.load %arg9[%c0_40, %c127_41] : memref<8x256xbf16, #tpu.memory_space<vmem>>, vector<8x3xbf16>
    tpu.vector_store %arg9[%c0_40, %c127_41], %38 {strides = array<i32>} : memref<8x256xbf16, #tpu.memory_space<vmem>>, vector<8x3xbf16>,
    %c0_42 = arith.constant 0 : index
    %c0_43 = arith.constant 0 : index
    %c0_44 = arith.constant 0 : index
    %40 = vector.load %arg6[%c0_42, %c0_43, %c0_44] : memref<3x8x8xbf16, #tpu.memory_space<vmem>>, vector<1x8x8xbf16>
    %41 = vector.shape_cast %40 : vector<1x8x8xbf16> to vector<8x8xbf16>
    %c0_45 = arith.constant 0 : index
    %c0_46 = arith.constant 0 : index
    %42 = vector.load %arg9[%c0_45, %c0_46] : memref<8x256xbf16, #tpu.memory_space<vmem>>, vector<8x128xbf16>
    %cst_47 = arith.constant dense<0.000000e+00> : vector<8x128xf32>
    %43 = tpu.matmul %41, %42, %cst_47 {dimension_numbers = #tpu.dot_dimension_numbers<[1], [0], [0], [1], [0, 0, 1, 1], [], []>} : vector<8x8xbf16>, vector<8x128xbf16>, vector<8x128xf32> -> vector<8x128xf32>
    %c1_48 = arith.constant 1 : index
    %c0_49 = arith.constant 0 : index
    %c0_50 = arith.constant 0 : index
    %44 = vector.load %arg6[%c1_48, %c0_49, %c0_50] : memref<3x8x8xbf16, #tpu.memory_space<vmem>>, vector<1x8x8xbf16>
    %45 = vector.shape_cast %44 : vector<1x8x8xbf16> to vector<8x8xbf16>
    %c0_51 = arith.constant 0 : index
    %c1_52 = arith.constant 1 : index
    %46 = vector.load %arg9[%c0_51, %c1_52] : memref<8x256xbf16, #tpu.memory_space<vmem>>, vector<8x128xbf16>
    %cst_53 = arith.constant dense<0.000000e+00> : vector<8x128xf32>
    %47 = tpu.matmul %45, %46, %cst_53 {dimension_numbers = #tpu.dot_dimension_numbers<[1], [0], [0], [1], [0, 0, 1, 1], [], []>} : vector<8x8xbf16>, vector<8x128xbf16>, vector<8x128xf32> -> vector<8x128xf32>
    %48 = arith.addf %43, %47 : vector<8x128xf32>
    %c2 = arith.constant 2 : index
    %c0_54 = arith.constant 0 : index
    %c0_55 = arith.constant 0 : index
    %49 = vector.load %arg6[%c2, %c0_54, %c0_55] : memref<3x8x8xbf16, #tpu.memory_space<vmem>>, vector<1x8x8xbf16>
    %50 = vector.shape_cast %49 : vector<1x8x8xbf16> to vector<8x8xbf16>
    %c0_56 = arith.constant 0 : index
    %c2_57 = arith.constant 2 : index
    %51 = vector.load %arg9[%c0_56, %c2_57] : memref<8x256xbf16, #tpu.memory_space<vmem>>, vector<8x128xbf16>
    %cst_58 = arith.constant dense<0.000000e+00> : vector<8x128xf32>
    %52 = tpu.matmul %50, %51, %cst_58 {dimension_numbers = #tpu.dot_dimension_numbers<[1], [0], [0], [1], [0, 0, 1, 1], [], []>} : vector<8x8xbf16>, vector<8x128xbf16>, vector<8x128xf32> -> vector<8x128xf32>
    %53 = arith.addf %48, %52 : vector<8x128xf32>
    %c0_59 = arith.constant 0 : index
    %c0_60 = arith.constant 0 : index
    %54 = vector.load %arg7[%c0_59, %c0_60] : memref<8x1xf32, #tpu.memory_space<vmem>>, vector<8x1xf32>
    %55 = vector.broadcast %54 : vector<8x1xf32> to vector<8x128xf32>
    %56 = arith.addf %53, %55 : vector<8x128xf32>
    %cst_61 = arith.constant 0.000000e+00 : f32
    %57 = vector.broadcast %cst_61 : f32 to vector<8x128xf32>
    %58 = arith.maximumf %56, %57 : vector<8x128xf32>
    %c0_62 = arith.constant 0 : index
    %c0_63 = arith.constant 0 : index
    %c0_64 = arith.constant 0 : index
    %59 = vector.load %arg8[%c0_62, %c0_63, %c0_64] : memref<1x8x128xf32, #tpu.memory_space<vmem>>, vector<1x8x128xf32>
    %60 = vector.shape_cast %59 : vector<1x8x128xf32> to vector<8x128xf32>
    %61 = vector.shape_cast %58 : vector<8x128xf32> to vector<1x8x128xf32>
    tpu.vector_store %arg8[%c0_62, %c0_63, %c0_64], %61 {strides = array<i32>} : memref<1x8x128xf32, #tpu.memory_space<vmem>>, vector<1x8x128xf32>,
    return
  }
  func.func @transform_0(%arg0: i32, %arg1: i32) -> (i32, i32, i32) {
    %c0_i32 = arith.constant 0 : i32
    %c0_i32_0 = arith.constant 0 : i32
    return %arg1, %c0_i32, %arg0 : i32, i32, i32
  }
  func.func @transform_1(%arg0: i32, %arg1: i32) -> (i32, i32, i32) {
    %c1_i32 = arith.constant 1 : i32
    %0 = arith.addi %arg0, %c1_i32 : i32
    %c1_i32_0 = arith.constant 1 : i32
    %1 = arith.muli %0, %c1_i32_0 : i32
    %c0_i32 = arith.constant 0 : i32
    %c0_i32_1 = arith.constant 0 : i32
    return %arg1, %c0_i32, %1 : i32, i32, i32
  }
  func.func @transform_2(%arg0: i32, %arg1: i32) -> (i32, i32, i32) {
    %c0_i32 = arith.constant 0 : i32
    %c0_i32_0 = arith.constant 0 : i32
    %c0_i32_1 = arith.constant 0 : i32
    %c0_i32_2 = arith.constant 0 : i32
    return %c0_i32, %c0_i32_0, %c0_i32_1 : i32, i32, i32
  }
  func.func @transform_3(%arg0: i32, %arg1: i32) -> (i32, i32) {
    %c0_i32 = arith.constant 0 : i32
    %c0_i32_0 = arith.constant 0 : i32
    %c0_i32_1 = arith.constant 0 : i32
    return %c0_i32, %c0_i32_0 : i32, i32
  }
  func.func @transform_4(%arg0: i32, %arg1: i32) -> (i32, i32, i32) {
    %c0_i32 = arith.constant 0 : i32
    %c0_i32_0 = arith.constant 0 : i32
    %c0_i32_1 = arith.constant 0 : i32
    %c0_i32_2 = arith.constant 0 : i32
    return %c0_i32, %c0_i32_0, %c0_i32_1 : i32, i32, i32
  }
  func.func @transform_5(%arg0: i32, %arg1: i32) -> (i32, i32) {
    %c0_i32 = arith.constant 0 : i32
    %c0_i32_0 = arith.constant 0 : i32
    %c0_i32_1 = arith.constant 0 : i32
    return %c0_i32, %c0_i32_0 : i32, i32
  }
  func.func @transform_6(%arg0: i32, %arg1: i32) -> (i32, i32, i32) {
    %c0_i32 = arith.constant 0 : i32
    %c0_i32_0 = arith.constant 0 : i32
    return %arg1, %c0_i32, %arg0 : i32, i32, i32
  }
}

</mosaic_0001>

<llo_original>
// kernel: encoder_block_forward.1
$region0: #{encoder_block_forward.1}
  #allocation0 [shape = 'u32[]', space=smem, size = 0x4, offset = 0x4, fixed_abs, tag = 'smem constant byte address 0x4 - core index']
  #allocation1 [shape = 'u32[144,128]{1,0:T(1,128)}', space=vmem, size = 0x12000, scoped, tag = 'internal scratch']
  #allocation2 [shape = 'bf16[8,256]{1,0:T(8,128)(2,1)}', space=vmem, size = 0x1000, scoped, tag = 'scratch operand']
  #allocation3 [shape = 'bf16[8,128]{1,0:T(8,128)(2,1)}', space=vmem, size = 0x800, scoped, tag = 'scratch operand']
  %s0 = inlined_call_operand.vmem [shape: bf16[2,8,256], index: 0, kind: input, shape index: {}, may-alias: {0,1}]
  %s1 = inlined_call_operand.vmem [shape: bf16[2,8,256], index: 1, kind: input, shape index: {}, may-alias: {0,1}]
  %s2 = inlined_call_operand.vmem [shape: bf16[2,8,8], index: 2, kind: input, shape index: {}]
  %s3 = inlined_call_operand.vmem [shape: f32[8,1], index: 3, kind: input, shape index: {}]
  %s4 = inlined_call_operand.vmem [shape: bf16[3,8,8], index: 4, kind: input, shape index: {}]
  %s5 = inlined_call_operand.vmem [shape: f32[8,1], index: 5, kind: input, shape index: {}]
  %s6 = inlined_call_operand.hbm [shape: f32[2,8,128], index: 6, kind: output, shape index: {}]
  %s7 = sld [smem:[#allocation0]]
  $region57: #{encoder_block_forward.1} parent=0
    _
  %s9 = ssub.s32 1, %s7
  %s10 = scalar_select 0, %s9, %s7
  $region1: #{encoder_block_forward.1} parent=0
    #allocation4 [shape = 'u8[8192]{0}', space=vmem, size = 0x2000, scoped, tag = 'output window, operand 0']
    #allocation5 [shape = 's32[2]{0}', space=sflag, size = 0x8, scoped, tag = 'scoped memory for encoder_block_forward.1']
    %11 = vsyncpa [#allocation5], 0
    %s12 = scalar_lea.sflag [#allocation5], 1
    %13 = vsyncpa %s12, 0
    loop: start=0, step=1, limit=4
    $region2: #{encoder_block_forward.1} parent=1 // loop_pre_header
      _
    $region3: #{encoder_block_forward.1} parent=1 // loop_header
      %s15 = sphi 0, %s19
      %p16 = scmp.ge.s32.totalorder %s15, 4
      %s22 = sphi 0, %s34
      %s23 = sphi 0, %s30
      %s24 = sphi 0, %s22
      %s25 = sphi 0, %s23
      %s26 = sphi 0, %s24
      %s27 = sphi 0, %s25
      %s39 = sphi 0, %s41
      %s42 = sphi 0, %s39
      %s43 = sphi 0, %s42
      %s59 = sphi 0, %s43
      %s69 = sphi 0, %s71
      %s72 = sphi 0, %s69
      %s73 = sphi 0, %s72
      %s89 = sphi 0, %s73
      %s93 = sphi 0, %s93
      %s95 = sphi 0, %s93
      %s96 = sphi 0, %s95
      %s110 = sphi 0, %s96
      %s114 = sphi 0, %s114
      %s116 = sphi 0, %s114
      %s117 = sphi 0, %s116
      %s131 = sphi 0, %s117
      %s135 = sphi 0, %s135
      %s137 = sphi 0, %s135
      %s138 = sphi 0, %s137
      %s152 = sphi 0, %s138
      %s156 = sphi 0, %s156
      %s158 = sphi 0, %s156
      %s159 = sphi 0, %s158
      %s173 = sphi 0, %s159
      %s181 = sphi 0, %s183
      %s184 = sphi 0, %s181
      %s185 = sphi 0, %s184
      %s201 = sphi 0, %s185
    $region4: #{encoder_block_forward.1} parent=1 // loop_header_branch
      %18 = sbr.rel (%p16) target = $region8
    $region5: #{encoder_block_forward.1} parent=1 // loop_body
      %s20 = ssub.s32 %s15, 1
      %s21 = ssub.s32 %s15, 2
      %s28 = sadd.s32 1, %s23
      %p29 = scmp.ge.s32.totalorder %s28, 2
      %s30 = scalar_select %p29, 0, %s28
      %s31 = sadd.s32 1, %s22
      %s32 = scalar_select %p29, %s31, %s22
      %p33 = scmp.ge.s32.totalorder %s32, 1
      %s34 = scalar_select %p33, 0, %s32
      %s35 = ssub.s32 %s23, %s30
      %s36 = ssub.s32 %s22, %s34
      %s37 = sor.u32 %s35, %s36
      %p38 = scmp.eq.s32.totalorder %s37, 0
      %s40 = sadd.s32 %s39, 1
      %s41 = scalar_select %p38, %s39, %s40
      %p44 = pneg %p38
      %p45 = scmp.eq.s32.totalorder %s15, 1
      %p46 = por %p44, %p45
      %p47 = scmp.ne.s32.totalorder %s39, %s42
      %p48 = scmp.eq.s32.totalorder %s15, 0
      %p49 = por %p47, %p48
      %p50 = scmp.ne.s32.totalorder %s39, %s42
      %p51 = scmp.eq.s32.totalorder %s20, 1
      %p52 = por %p50, %p51
      %p53 = scmp.ne.s32.totalorder %s42, %s43
      %p54 = scmp.eq.s32.totalorder %s20, 0
      %p55 = por %p53, %p54
      %p56 = scmp.ne.s32.totalorder %s42, %s43
      %p57 = scmp.eq.s32.totalorder %s21, 1
      %p58 = por %p56, %p57
      %p60 = scmp.ne.s32.totalorder %s43, %s59
      %p61 = scmp.eq.s32.totalorder %s21, 0
      %p62 = por %p60, %p61
      %s63 = sadd.s32 %s22, 1
      %s64 = sadd.s32 %s34, 1
      %s65 = ssub.s32 %s23, %s30
      %s66 = ssub.s32 %s63, %s64
      %s67 = sor.u32 %s65, %s66
      %p68 = scmp.eq.s32.totalorder %s67, 0
      %s70 = sadd.s32 %s69, 1
      %s71 = scalar_select %p68, %s69, %s70
      %p74 = pneg %p68
      %p75 = scmp.eq.s32.totalorder %s15, 1
      %p76 = por %p74, %p75
      %p77 = scmp.ne.s32.totalorder %s69, %s72
      %p78 = scmp.eq.s32.totalorder %s15, 0
      %p79 = por %p77, %p78
      %p80 = scmp.ne.s32.totalorder %s69, %s72
      %p81 = scmp.eq.s32.totalorder %s20, 1
      %p82 = por %p80, %p81
      %p83 = scmp.ne.s32.totalorder %s72, %s73
      %p84 = scmp.eq.s32.totalorder %s20, 0
      %p85 = por %p83, %p84
      %p86 = scmp.ne.s32.totalorder %s72, %s73
      %p87 = scmp.eq.s32.totalorder %s21, 1
      %p88 = por %p86, %p87
      %p90 = scmp.ne.s32.totalorder %s73, %s89
      %p91 = scmp.eq.s32.totalorder %s21, 0
      %p92 = por %p90, %p91
      %s94 = sadd.s32 %s93, 1
      %p97 = scmp.eq.s32.totalorder %s15, 1
      %p98 = scmp.ne.s32.totalorder %s93, %s95
      %p99 = scmp.eq.s32.totalorder %s15, 0
      %p100 = por %p98, %p99
      %p101 = scmp.ne.s32.totalorder %s93, %s95
      %p102 = scmp.eq.s32.totalorder %s20, 1
      %p103 = por %p101, %p102
      %p104 = scmp.ne.s32.totalorder %s95, %s96
      %p105 = scmp.eq.s32.totalorder %s20, 0
      %p106 = por %p104, %p105
      %p107 = scmp.ne.s32.totalorder %s95, %s96
      %p108 = scmp.eq.s32.totalorder %s21, 1
      %p109 = por %p107, %p108
      %p111 = scmp.ne.s32.totalorder %s96, %s110
      %p112 = scmp.eq.s32.totalorder %s21, 0
      %p113 = por %p111, %p112
      %s115 = sadd.s32 %s114, 1
      %p118 = scmp.eq.s32.totalorder %s15, 1
      %p119 = scmp.ne.s32.totalorder %s114, %s116
      %p120 = scmp.eq.s32.totalorder %s15, 0
      %p121 = por %p119, %p120
      %p122 = scmp.ne.s32.totalorder %s114, %s116
      %p123 = scmp.eq.s32.totalorder %s20, 1
      %p124 = por %p122, %p123
      %p125 = scmp.ne.s32.totalorder %s116, %s117
      %p126 = scmp.eq.s32.totalorder %s20, 0
      %p127 = por %p125, %p126
      %p128 = scmp.ne.s32.totalorder %s116, %s117
      %p129 = scmp.eq.s32.totalorder %s21, 1
      %p130 = por %p128, %p129
      %p132 = scmp.ne.s32.totalorder %s117, %s131
      %p133 = scmp.eq.s32.totalorder %s21, 0
      %p134 = por %p132, %p133
      %s136 = sadd.s32 %s135, 1
      %p139 = scmp.eq.s32.totalorder %s15, 1
      %p140 = scmp.ne.s32.totalorder %s135, %s137
      %p141 = scmp.eq.s32.totalorder %s15, 0
      %p142 = por %p140, %p141
      %p143 = scmp.ne.s32.totalorder %s135, %s137
      %p144 = scmp.eq.s32.totalorder %s20, 1
      %p145 = por %p143, %p144
      %p146 = scmp.ne.s32.totalorder %s137, %s138
      %p147 = scmp.eq.s32.totalorder %s20, 0
      %p148 = por %p146, %p147
      %p149 = scmp.ne.s32.totalorder %s137, %s138
      %p150 = scmp.eq.s32.totalorder %s21, 1
      %p151 = por %p149, %p150
      %p153 = scmp.ne.s32.totalorder %s138, %s152
      %p154 = scmp.eq.s32.totalorder %s21, 0
      %p155 = por %p153, %p154
      %s157 = sadd.s32 %s156, 1
      %p160 = scmp.eq.s32.totalorder %s15, 1
      %p161 = scmp.ne.s32.totalorder %s156, %s158
      %p162 = scmp.eq.s32.totalorder %s15, 0
      %p163 = por %p161, %p162
      %p164 = scmp.ne.s32.totalorder %s156, %s158
      %p165 = scmp.eq.s32.totalorder %s20, 1
      %p166 = por %p164, %p165
      %p167 = scmp.ne.s32.totalorder %s158, %s159
      %p168 = scmp.eq.s32.totalorder %s20, 0
      %p169 = por %p167, %p168
      %p170 = scmp.ne.s32.totalorder %s158, %s159
      %p171 = scmp.eq.s32.totalorder %s21, 1
      %p172 = por %p170, %p171
      %p174 = scmp.ne.s32.totalorder %s159, %s173
      %p175 = scmp.eq.s32.totalorder %s21, 0
      %p176 = por %p174, %p175
      %s177 = ssub.s32 %s23, %s30
      %s178 = ssub.s32 %s22, %s34
      %s179 = sor.u32 %s177, %s178
      %p180 = scmp.eq.s32.totalorder %s179, 0
      %s182 = sadd.s32 %s181, 1
      %s183 = scalar_select %p180, %s181, %s182
      %p186 = pneg %p180
      %p187 = scmp.eq.s32.totalorder %s15, 1
      %p188 = por %p186, %p187
      %p189 = scmp.ne.s32.totalorder %s181, %s184
      %p190 = scmp.eq.s32.totalorder %s15, 0
      %p191 = por %p189, %p190
      %p192 = scmp.ne.s32.totalorder %s181, %s184
      %p193 = scmp.eq.s32.totalorder %s20, 1
      %p194 = por %p192, %p193
      %p195 = scmp.ne.s32.totalorder %s184, %s185
      %p196 = scmp.eq.s32.totalorder %s20, 0
      %p197 = por %p195, %p196
      %p198 = scmp.ne.s32.totalorder %s184, %s185
      %p199 = scmp.eq.s32.totalorder %s21, 1
      %p200 = por %p198, %p199
      %p202 = scmp.ne.s32.totalorder %s185, %s201
      %p203 = scmp.eq.s32.totalorder %s21, 0
      %p204 = por %p202, %p203
      %p205 = scmp.le.s32.totalorder 1, %s15
      %p206 = scmp.lt.s32.totalorder %s15, 3
      %p207 = pnand %p205, %p206
      %p208 = pneg %p207
      // Predicated region
      $region9: #{encoder_block_forward.1} parent=5 // pred_check
        _
      $region10: #{encoder_block_forward.1} parent=5 // pred_check_branch
        %210 = sbr.rel (%p207) target = $region12
      $region11: #{encoder_block_forward.1} parent=5 // pred_region
        %s211 = ssub.s32 %s15, 1
        // Predicated region
        $region13: #{encoder_block_forward.1} parent=11 // pred_check
          %p212 = pneg %p106
        $region14: #{encoder_block_forward.1} parent=11 // pred_check_branch
          %214 = sbr.rel (%p212) target = $region16
        $region15: #{encoder_block_forward.1} parent=11 // pred_region
          _
        $region16: #{encoder_block_forward.1} parent=11 // pred_fallthru
          _
        // Predicated region
        $region17: #{encoder_block_forward.1} parent=11 // pred_check
          %p215 = pneg %p127
        $region18: #{encoder_block_forward.1} parent=11 // pred_check_branch
          %217 = sbr.rel (%p215) target = $region20
        $region19: #{encoder_block_forward.1} parent=11 // pred_region
          _
        $region20: #{encoder_block_forward.1} parent=11 // pred_fallthru
          _
        // Predicated region
        $region21: #{encoder_block_forward.1} parent=11 // pred_check
          %p218 = pneg %p148
        $region22: #{encoder_block_forward.1} parent=11 // pred_check_branch
          %220 = sbr.rel (%p218) target = $region24
        $region23: #{encoder_block_forward.1} parent=11 // pred_region
          _
        $region24: #{encoder_block_forward.1} parent=11 // pred_fallthru
          _
        // Predicated region
        $region25: #{encoder_block_forward.1} parent=11 // pred_check
          %p221 = pneg %p169
        $region26: #{encoder_block_forward.1} parent=11 // pred_check_branch
          %223 = sbr.rel (%p221) target = $region28
        $region27: #{encoder_block_forward.1} parent=11 // pred_region
          _
        $region28: #{encoder_block_forward.1} parent=11 // pred_fallthru
          _
      $region12: #{encoder_block_forward.1} parent=5 // pred_fallthru
        _
      %p224 = scmp.lt.s32.totalorder %s15, 2
      // Predicated region
      $region29: #{encoder_block_forward.1} parent=5 // pred_check
        %p225 = pneg %p224
      $region30: #{encoder_block_forward.1} parent=5 // pred_check_branch
        %227 = sbr.rel (%p225) target = $region32
      $region31: #{encoder_block_forward.1} parent=5 // pred_region
        // Predicated region
        $region33: #{encoder_block_forward.1} parent=31 // pred_check
          %p228 = pneg %p49
        $region34: #{encoder_block_forward.1} parent=31 // pred_check_branch
          %230 = sbr.rel (%p228) target = $region36
        $region35: #{encoder_block_forward.1} parent=31 // pred_region
          %p231 = scmp.lt.s32.totalorder %s23, 1
          %s232 = scalar_select %p231, %s23, 1
          %p233 = scmp.lt.s32.totalorder %s22, 1
          %s234 = scalar_select %p233, %s22, 1
          %s235 = smul.addr %s232, 2
          %s236 = sadd.s32 %s234, %s235
          %s237 = smul.addr %s236, 4
          %s238 = scalar_lea.vmem %s0, %s237
        $region36: #{encoder_block_forward.1} parent=31 // pred_fallthru
          _
        // Predicated region
        $region37: #{encoder_block_forward.1} parent=31 // pred_check
          %p239 = pneg %p79
        $region38: #{encoder_block_forward.1} parent=31 // pred_check_branch
          %241 = sbr.rel (%p239) target = $region40
        $region39: #{encoder_block_forward.1} parent=31 // pred_region
          %s242 = sadd.s32 %s22, 1
          %p243 = scmp.lt.s32.totalorder %s23, 1
          %s244 = scalar_select %p243, %s23, 1
          %p245 = scmp.lt.s32.totalorder %s242, 1
          %s246 = scalar_select %p245, %s242, 1
          %s247 = smul.addr %s244, 2
          %s248 = sadd.s32 %s246, %s247
          %s249 = smul.addr %s248, 4
          %s250 = scalar_lea.vmem %s1, %s249
          %s251 = sadd.s32 %s22, 1
        $region40: #{encoder_block_forward.1} parent=31 // pred_fallthru
          _
      $region32: #{encoder_block_forward.1} parent=5 // pred_fallthru
        _
      %p252 = scmp.le.s32.totalorder 1, %s15
      %p253 = scmp.lt.s32.totalorder %s15, 3
      %p254 = pnand %p252, %p253
      %p255 = pneg %p254
      // Predicated region
      $region41: #{encoder_block_forward.1} parent=5 // pred_check
        _
      $region42: #{encoder_block_forward.1} parent=5 // pred_check_branch
        %257 = sbr.rel (%p254) target = $region44
      $region43: #{encoder_block_forward.1} parent=5 // pred_region
        %s258 = ssub.s32 %s15, 1
        %p259 = scmp.lt.s32.totalorder %s25, 1
        %s260 = scalar_select %p259, %s25, 1
        %p261 = scmp.lt.s32.totalorder %s24, 1
        %s262 = scalar_select %p261, %s24, 1
        %s263 = smul.addr %s260, 2
        %s264 = sadd.s32 %s262, %s263
        %s265 = smul.addr %s264, 4
        %s266 = scalar_lea.vmem %s0, %s265
        %p267 = pneg %p55
        %p268 = pneg %p52
        %s269 = sadd.s32 %s24, 1
        %p270 = scmp.lt.s32.totalorder %s25, 1
        %s271 = scalar_select %p270, %s25, 1
        %p272 = scmp.lt.s32.totalorder %s269, 1
        %s273 = scalar_select %p272, %s269, 1
        %s274 = smul.addr %s271, 2
        %s275 = sadd.s32 %s273, %s274
        %s276 = smul.addr %s275, 4
        %s277 = scalar_lea.vmem %s1, %s276
        %p278 = pneg %p85
        %p279 = pneg %p82
        %p280 = pneg %p106
        %p281 = pneg %p103
        %p282 = pneg %p127
        %p283 = pneg %p124
        %p284 = pneg %p148
        %p285 = pneg %p145
        %p286 = pneg %p169
        %p287 = pneg %p166
        %p288 = pneg %p197
        %p289 = pneg %p194
        %s290 = sand.u32 %s184, 1
        %s291 = scalar_lea.sflag [#allocation5], %s290
        %s292 = sand.u32 %s184, 1
        %s293 = smul.addr %s292, 8
        %s294 = scalar_lea.vmem [#allocation4], %s293
        %p295 = scmp.lt.s32.totalorder %s25, 1
        %s296 = scalar_select %p295, %s25, 1
        %p297 = scmp.lt.s32.totalorder %s24, 1
        %s298 = scalar_select %p297, %s24, 1
        %s299 = smul.addr %s296, 2
        %s300 = sadd.s32 %s298, %s299
        %s301 = smul.addr %s300, 4
        %s302 = scalar_lea.vmem %s0, %s301
        %s303 = sadd.s32 %s24, 1
        %p304 = scmp.lt.s32.totalorder %s25, 1
        %s305 = scalar_select %p304, %s25, 1
        %p306 = scmp.lt.s32.totalorder %s303, 1
        %s307 = scalar_select %p306, %s303, 1
        %s308 = smul.addr %s305, 2
        %s309 = sadd.s32 %s307, %s308
        %s310 = smul.addr %s309, 4
        %s311 = scalar_lea.vmem %s1, %s310
        %s312 = sadd.s32 %s24, 1
        %v314 = vld [vmem:[%s2] sm:$0xf]
        %v315 = vld [vmem:[%s302] sm:$0xf]
        %s316 = scalar_lea.vmem %s2, 4
        %v317 = vld [vmem:[%s316] sm:$0xf]
        %v319 = vunpack.c.l.b16 %v315
        %v320 = vpack.c.b16 %v319, %v319
        %321 = vrot.lane.b32.xlu0 %v320, 127
        %v322 = vpop.permute.xlu0 %321
        %vm323 = vcmask 64512
        %v325 = vsel %vm323, %v317, 0
        %vm327 = vcmask 1043456
        %v329 = vsel %vm327, %v322, 0
        %331 = vmatprep.subr.bf16.mxu0 0
        %332 = vmatpush1.bf16.msra.mxu0 0
        %333 = vmatprep.subr.bf16.mxu0 0
        %334 = vmatpush1.bf16.msra.mxu0 0
        %335 = vmatprep.subr.bf16.mxu0 0
        %336 = vmatpush1.bf16.msra.mxu0 0
        %337 = vmatprep.subr.bf16.mxu0 0
        %338 = vmatpush1.bf16.msra.mxu0 0
        %339 = vmatprep.subr.bf16.mxu0 0
        %340 = vmatpush1.bf16.msra.mxu0 0
        %341 = vmatprep.subr.bf16.mxu0 0
        %342 = vmatpush1.bf16.msra.mxu0 0
        %343 = vmatprep.subr.bf16.mxu0 0
        %344 = vmatpush1.bf16.msra.mxu0 0
        %345 = vmatprep.subr.bf16.mxu0 0
        %346 = vmatpush1.bf16.msra.mxu0 %v329
        %347 = vmatprep.subr.bf16.mxu0 0
        %348 = vmatpush2.bf16.msra.mxu0 0
        %349 = vmatprep.subr.bf16.mxu0 0
        %350 = vmatpush2.bf16.msra.mxu0 0
        %351 = vmatprep.subr.bf16.mxu0 0
        %352 = vmatpush2.bf16.msra.mxu0 0
        %353 = vmatprep.subr.bf16.mxu0 0
        %354 = vmatpush2.bf16.msra.mxu0 0
        %355 = vmatprep.subr.bf16.mxu0 0
        %356 = vmatpush2.bf16.msra.mxu0 0
        %357 = vmatprep.subr.bf16.mxu0 0
        %358 = vmatpush2.bf16.msra.mxu0 0
        %359 = vmatprep.subr.bf16.mxu0 0
        %360 = vmatpush2.bf16.msra.mxu0 0
        %361 = vmatprep.subr.bf16.mxu0 0
        %362 = vmatpush2.bf16.msra.mxu0 0
        %363 = vmatprep.mubr.bf16.mxu0 0
        %364 = vmatmul.mubr.bf16.gmra.mxu0 %v325
        %v365 = vpop.f32.mrf.mxu0
        %v366 = vadd.f32 0.0, %v365
        %v367 = vpop.f32.mrf.mxu0
        %v368 = vpop.f32.mrf.mxu0
        %v369 = vpop.f32.mrf.mxu0
        %370 = vdwg.mxu0
        %v372 = vsel %vm323, %v314, 0
        %v375 = vsel %vm327, %v315, 0
        %377 = vmatprep.subr.bf16.mxu0 0
        %378 = vmatpush1.bf16.msra.mxu0 0
        %379 = vmatprep.subr.bf16.mxu0 0
        %380 = vmatpush1.bf16.msra.mxu0 0
        %381 = vmatprep.subr.bf16.mxu0 0
        %382 = vmatpush1.bf16.msra.mxu0 0
        %383 = vmatprep.subr.bf16.mxu0 0
        %384 = vmatpush1.bf16.msra.mxu0 0
        %385 = vmatprep.subr.bf16.mxu0 0
        %386 = vmatpush1.bf16.msra.mxu0 0
        %387 = vmatprep.subr.bf16.mxu0 0
        %388 = vmatpush1.bf16.msra.mxu0 0
        %389 = vmatprep.subr.bf16.mxu0 0
        %390 = vmatpush1.bf16.msra.mxu0 0
        %391 = vmatprep.subr.bf16.mxu0 0
        %392 = vmatpush1.bf16.msra.mxu0 %v375
        %393 = vmatprep.subr.bf16.mxu0 0
        %394 = vmatpush2.bf16.msra.mxu0 0
        %395 = vmatprep.subr.bf16.mxu0 0
        %396 = vmatpush2.bf16.msra.mxu0 0
        %397 = vmatprep.subr.bf16.mxu0 0
        %398 = vmatpush2.bf16.msra.mxu0 0
        %399 = vmatprep.subr.bf16.mxu0 0
        %400 = vmatpush2.bf16.msra.mxu0 0
        %401 = vmatprep.subr.bf16.mxu0 0
        %402 = vmatpush2.bf16.msra.mxu0 0
        %403 = vmatprep.subr.bf16.mxu0 0
        %404 = vmatpush2.bf16.msra.mxu0 0
        %405 = vmatprep.subr.bf16.mxu0 0
        %406 = vmatpush2.bf16.msra.mxu0 0
        %407 = vmatprep.subr.bf16.mxu0 0
        %408 = vmatpush2.bf16.msra.mxu0 0
        %409 = vmatprep.mubr.bf16.mxu0 0
        %410 = vmatmul.mubr.bf16.gmra.mxu0 %v372
        %v411 = vpop.f32.mrf.mxu0
        %v412 = vadd.f32 %v366, %v411
        %v413 = vpop.f32.mrf.mxu0
        %v414 = vpop.f32.mrf.mxu0
        %v415 = vpop.f32.mrf.mxu0
        %416 = vdwg.mxu0
        %v417 = vld [vmem:[%s3] sm:$0xff]
        %419 = vset.pattern.permute.xlu0 0
        %420 = vperm.xlu0 %419, %v417
        %v421 = vpop.permute.xlu0 %420
        %v423 = vadd.f32 %v412, %v421
        %v424 = vmax.f32 %v423, 0.0
        %v425 = vpack.c.bf16 %v424, %v424
        %vm426 = vcmask 1035264
        %427 = vst.msk [vmem:[#allocation2] sm:$0xf] %vm426, %v425
        %v428 = vld [vmem:[%s302] sm:$0xf]
        %430 = vrot.lane.b32.xlu0 %v428, 1
        %v431 = vpop.permute.xlu0 %430
        %vm433 = vcmask 3072
        %434 = vst.msk [vmem:[#allocation3] sm:$0xf] %vm433, %v431
        %v435 = vld [vmem:[%s311] sm:$0xf]
        %437 = vrot.lane.b32.xlu0 %v435, 1
        %v438 = vpop.permute.xlu0 %437
        %vm440 = vcmask 27656
        %441 = vst.msk [vmem:[#allocation3] sm:$0xf] %vm440, %v438
        %v442 = vld [vmem:[%s2] sm:$0xf]
        %v443 = vld [vmem:[#allocation3] sm:$0xf]
        %v444 = vld [vmem:[%s316] sm:$0xf]
        %v446 = vunpack.c.l.b16 %v443
        %v447 = vpack.c.b16 %v446, %v446
        %448 = vrot.lane.b32.xlu0 %v447, 127
        %v449 = vpop.permute.xlu0 %448
        %v451 = vsel %vm323, %v444, 0
        %v454 = vsel %vm327, %v449, 0
        %456 = vmatprep.subr.bf16.mxu0 0
        %457 = vmatpush1.bf16.msra.mxu0 0
        %458 = vmatprep.subr.bf16.mxu0 0
        %459 = vmatpush1.bf16.msra.mxu0 0
        %460 = vmatprep.subr.bf16.mxu0 0
        %461 = vmatpush1.bf16.msra.mxu0 0
        %462 = vmatprep.subr.bf16.mxu0 0
        %463 = vmatpush1.bf16.msra.mxu0 0
        %464 = vmatprep.subr.bf16.mxu0 0
        %465 = vmatpush1.bf16.msra.mxu0 0
        %466 = vmatprep.subr.bf16.mxu0 0
        %467 = vmatpush1.bf16.msra.mxu0 0
        %468 = vmatprep.subr.bf16.mxu0 0
        %469 = vmatpush1.bf16.msra.mxu0 0
        %470 = vmatprep.subr.bf16.mxu0 0
        %471 = vmatpush1.bf16.msra.mxu0 %v454
        %472 = vmatprep.subr.bf16.mxu0 0
        %473 = vmatpush2.bf16.msra.mxu0 0
        %474 = vmatprep.subr.bf16.mxu0 0
        %475 = vmatpush2.bf16.msra.mxu0 0
        %476 = vmatprep.subr.bf16.mxu0 0
        %477 = vmatpush2.bf16.msra.mxu0 0
        %478 = vmatprep.subr.bf16.mxu0 0
        %479 = vmatpush2.bf16.msra.mxu0 0
        %480 = vmatprep.subr.bf16.mxu0 0
        %481 = vmatpush2.bf16.msra.mxu0 0
        %482 = vmatprep.subr.bf16.mxu0 0
        %483 = vmatpush2.bf16.msra.mxu0 0
        %484 = vmatprep.subr.bf16.mxu0 0
        %485 = vmatpush2.bf16.msra.mxu0 0
        %486 = vmatprep.subr.bf16.mxu0 0
        %487 = vmatpush2.bf16.msra.mxu0 0
        %488 = vmatprep.mubr.bf16.mxu0 0
        %489 = vmatmul.mubr.bf16.gmra.mxu0 %v451
        %v490 = vpop.f32.mrf.mxu0
        %v491 = vadd.f32 0.0, %v490
        %v492 = vpop.f32.mrf.mxu0
        %v493 = vpop.f32.mrf.mxu0
        %v494 = vpop.f32.mrf.mxu0
        %495 = vdwg.mxu0
        %v497 = vsel %vm323, %v442, 0
        %v500 = vsel %vm327, %v443, 0
        %502 = vmatprep.subr.bf16.mxu0 0
        %503 = vmatpush1.bf16.msra.mxu0 0
        %504 = vmatprep.subr.bf16.mxu0 0
        %505 = vmatpush1.bf16.msra.mxu0 0
        %506 = vmatprep.subr.bf16.mxu0 0
        %507 = vmatpush1.bf16.msra.mxu0 0
        %508 = vmatprep.subr.bf16.mxu0 0
        %509 = vmatpush1.bf16.msra.mxu0 0
        %510 = vmatprep.subr.bf16.mxu0 0
        %511 = vmatpush1.bf16.msra.mxu0 0
        %512 = vmatprep.subr.bf16.mxu0 0
        %513 = vmatpush1.bf16.msra.mxu0 0
        %514 = vmatprep.subr.bf16.mxu0 0
        %515 = vmatpush1.bf16.msra.mxu0 0
        %516 = vmatprep.subr.bf16.mxu0 0
        %517 = vmatpush1.bf16.msra.mxu0 %v500
        %518 = vmatprep.subr.bf16.mxu0 0
        %519 = vmatpush2.bf16.msra.mxu0 0
        %520 = vmatprep.subr.bf16.mxu0 0
        %521 = vmatpush2.bf16.msra.mxu0 0
        %522 = vmatprep.subr.bf16.mxu0 0
        %523 = vmatpush2.bf16.msra.mxu0 0
        %524 = vmatprep.subr.bf16.mxu0 0
        %525 = vmatpush2.bf16.msra.mxu0 0
        %526 = vmatprep.subr.bf16.mxu0 0
        %527 = vmatpush2.bf16.msra.mxu0 0
        %528 = vmatprep.subr.bf16.mxu0 0
        %529 = vmatpush2.bf16.msra.mxu0 0
        %530 = vmatprep.subr.bf16.mxu0 0
        %531 = vmatpush2.bf16.msra.mxu0 0
        %532 = vmatprep.subr.bf16.mxu0 0
        %533 = vmatpush2.bf16.msra.mxu0 0
        %534 = vmatprep.mubr.bf16.mxu0 0
        %535 = vmatmul.mubr.bf16.gmra.mxu0 %v497
        %v536 = vpop.f32.mrf.mxu0
        %v537 = vadd.f32 %v491, %v536
        %v538 = vpop.f32.mrf.mxu0
        %v539 = vpop.f32.mrf.mxu0
        %v540 = vpop.f32.mrf.mxu0
        %541 = vdwg.mxu0
        %v542 = vld [vmem:[%s3] sm:$0xff]
        %544 = vset.pattern.permute.xlu0 0
        %545 = vperm.xlu0 %544, %v542
        %v546 = vpop.permute.xlu0 %545
        %v548 = vadd.f32 %v537, %v546
        %v549 = vmax.f32 %v548, 0.0
        %v550 = vpack.c.bf16 %v549, %v549
        %v552 = vunpack.c.l.b16 %v550
        %v553 = vpack.c.b16 %v552, %v552
        %554 = vrot.lane.b32.xlu0 %v553, 127
        %v555 = vpop.permute.xlu0 %554
        %v556 = vrot.slane %v555, 4
        %vm557 = vcmask 1039360
        %v558 = vsel %vm557, %v556, %v555
        %vm560 = vcmask 1044472
        %vm561 = vcmask 15364
        %vm562 = vmor %vm561, %vm560
        %563 = vst.msk [vmem:[#allocation2] sm:$0xff] %vm562, %v558
        %v564 = vld [vmem:[%s4] sm:$0xf]
        %v565 = vld [vmem:[#allocation2] sm:$0xf]
        %s566 = scalar_lea.vmem %s4, 4
        %v567 = vld [vmem:[%s566] sm:$0xf]
        %v568 = vld [vmem:[#allocation2] sm:$0xff]
        %v570 = vunpack.c.l.b16 %v568
        %v571 = vunpack.c.h.b16 %v568
        %v572 = vpack.c.b16 %v570, %v570
        %v573 = vpack.c.b16 %v571, %v571
        %574 = vrot.lane.b32.xlu0 %v572, 127
        %v575 = vpop.permute.xlu0 %574
        %576 = vrot.lane.b32.xlu0 %v573, 127
        %v577 = vpop.permute.xlu0 %576
        %v578 = vsel %vm557, %v575, %v577
        %v580 = vsel %vm323, %v567, 0
        %v583 = vsel %vm327, %v578, 0
        %585 = vmatprep.subr.bf16.mxu0 0
        %586 = vmatpush1.bf16.msra.mxu0 0
        %587 = vmatprep.subr.bf16.mxu0 0
        %588 = vmatpush1.bf16.msra.mxu0 0
        %589 = vmatprep.subr.bf16.mxu0 0
        %590 = vmatpush1.bf16.msra.mxu0 0
        %591 = vmatprep.subr.bf16.mxu0 0
        %592 = vmatpush1.bf16.msra.mxu0 0
        %593 = vmatprep.subr.bf16.mxu0 0
        %594 = vmatpush1.bf16.msra.mxu0 0
        %595 = vmatprep.subr.bf16.mxu0 0
        %596 = vmatpush1.bf16.msra.mxu0 0
        %597 = vmatprep.subr.bf16.mxu0 0
        %598 = vmatpush1.bf16.msra.mxu0 0
        %599 = vmatprep.subr.bf16.mxu0 0
        %600 = vmatpush1.bf16.msra.mxu0 %v583
        %601 = vmatprep.subr.bf16.mxu0 0
        %602 = vmatpush2.bf16.msra.mxu0 0
        %603 = vmatprep.subr.bf16.mxu0 0
        %604 = vmatpush2.bf16.msra.mxu0 0
        %605 = vmatprep.subr.bf16.mxu0 0
        %606 = vmatpush2.bf16.msra.mxu0 0
        %607 = vmatprep.subr.bf16.mxu0 0
        %608 = vmatpush2.bf16.msra.mxu0 0
        %609 = vmatprep.subr.bf16.mxu0 0
        %610 = vmatpush2.bf16.msra.mxu0 0
        %611 = vmatprep.subr.bf16.mxu0 0
        %612 = vmatpush2.bf16.msra.mxu0 0
        %613 = vmatprep.subr.bf16.mxu0 0
        %614 = vmatpush2.bf16.msra.mxu0 0
        %615 = vmatprep.subr.bf16.mxu0 0
        %616 = vmatpush2.bf16.msra.mxu0 0
        %617 = vmatprep.mubr.bf16.mxu0 0
        %618 = vmatmul.mubr.bf16.gmra.mxu0 %v580
        %v619 = vpop.f32.mrf.mxu0
        %v620 = vadd.f32 0.0, %v619
        %v621 = vpop.f32.mrf.mxu0
        %v622 = vpop.f32.mrf.mxu0
        %v623 = vpop.f32.mrf.mxu0
        %624 = vdwg.mxu0
        %v626 = vsel %vm323, %v564, 0
        %v629 = vsel %vm327, %v565, 0
        %631 = vmatprep.subr.bf16.mxu0 0
        %632 = vmatpush1.bf16.msra.mxu0 0
        %633 = vmatprep.subr.bf16.mxu0 0
        %634 = vmatpush1.bf16.msra.mxu0 0
        %635 = vmatprep.subr.bf16.mxu0 0
        %636 = vmatpush1.bf16.msra.mxu0 0
        %637 = vmatprep.subr.bf16.mxu0 0
        %638 = vmatpush1.bf16.msra.mxu0 0
        %639 = vmatprep.subr.bf16.mxu0 0
        %640 = vmatpush1.bf16.msra.mxu0 0
        %641 = vmatprep.subr.bf16.mxu0 0
        %642 = vmatpush1.bf16.msra.mxu0 0
        %643 = vmatprep.subr.bf16.mxu0 0
        %644 = vmatpush1.bf16.msra.mxu0 0
        %645 = vmatprep.subr.bf16.mxu0 0
        %646 = vmatpush1.bf16.msra.mxu0 %v629
        %647 = vmatprep.subr.bf16.mxu0 0
        %648 = vmatpush2.bf16.msra.mxu0 0
        %649 = vmatprep.subr.bf16.mxu0 0
        %650 = vmatpush2.bf16.msra.mxu0 0
        %651 = vmatprep.subr.bf16.mxu0 0
        %652 = vmatpush2.bf16.msra.mxu0 0
        %653 = vmatprep.subr.bf16.mxu0 0
        %654 = vmatpush2.bf16.msra.mxu0 0
        %655 = vmatprep.subr.bf16.mxu0 0
        %656 = vmatpush2.bf16.msra.mxu0 0
        %657 = vmatprep.subr.bf16.mxu0 0
        %658 = vmatpush2.bf16.msra.mxu0 0
        %659 = vmatprep.subr.bf16.mxu0 0
        %660 = vmatpush2.bf16.msra.mxu0 0
        %661 = vmatprep.subr.bf16.mxu0 0
        %662 = vmatpush2.bf16.msra.mxu0 0
        %663 = vmatprep.mubr.bf16.mxu0 0
        %664 = vmatmul.mubr.bf16.gmra.mxu0 %v626
        %v665 = vpop.f32.mrf.mxu0
        %v666 = vadd.f32 %v620, %v665
        %v667 = vpop.f32.mrf.mxu0
        %v668 = vpop.f32.mrf.mxu0
        %v669 = vpop.f32.mrf.mxu0
        %670 = vdwg.mxu0
        %s671 = scalar_lea.vmem %s4, 8
        %v672 = vld [vmem:[%s671] sm:$0xf]
        %673 = vrot.lane.b32.xlu0 %v572, 126
        %v674 = vpop.permute.xlu0 %673
        %675 = vrot.lane.b32.xlu0 %v573, 126
        %v676 = vpop.permute.xlu0 %675
        %vm677 = vcmask 1031168
        %v678 = vsel %vm677, %v674, %v676
        %v680 = vsel %vm323, %v672, 0
        %v683 = vsel %vm327, %v678, 0
        %685 = vmatprep.subr.bf16.mxu0 0
        %686 = vmatpush1.bf16.msra.mxu0 0
        %687 = vmatprep.subr.bf16.mxu0 0
        %688 = vmatpush1.bf16.msra.mxu0 0
        %689 = vmatprep.subr.bf16.mxu0 0
        %690 = vmatpush1.bf16.msra.mxu0 0
        %691 = vmatprep.subr.bf16.mxu0 0
        %692 = vmatpush1.bf16.msra.mxu0 0
        %693 = vmatprep.subr.bf16.mxu0 0
        %694 = vmatpush1.bf16.msra.mxu0 0
        %695 = vmatprep.subr.bf16.mxu0 0
        %696 = vmatpush1.bf16.msra.mxu0 0
        %697 = vmatprep.subr.bf16.mxu0 0
        %698 = vmatpush1.bf16.msra.mxu0 0
        %699 = vmatprep.subr.bf16.mxu0 0
        %700 = vmatpush1.bf16.msra.mxu0 %v683
        %701 = vmatprep.subr.bf16.mxu0 0
        %702 = vmatpush2.bf16.msra.mxu0 0
        %703 = vmatprep.subr.bf16.mxu0 0
        %704 = vmatpush2.bf16.msra.mxu0 0
        %705 = vmatprep.subr.bf16.mxu0 0
        %706 = vmatpush2.bf16.msra.mxu0 0
        %707 = vmatprep.subr.bf16.mxu0 0
        %708 = vmatpush2.bf16.msra.mxu0 0
        %709 = vmatprep.subr.bf16.mxu0 0
        %710 = vmatpush2.bf16.msra.mxu0 0
        %711 = vmatprep.subr.bf16.mxu0 0
        %712 = vmatpush2.bf16.msra.mxu0 0
        %713 = vmatprep.subr.bf16.mxu0 0
        %714 = vmatpush2.bf16.msra.mxu0 0
        %715 = vmatprep.subr.bf16.mxu0 0
        %716 = vmatpush2.bf16.msra.mxu0 0
        %717 = vmatprep.mubr.bf16.mxu0 0
        %718 = vmatmul.mubr.bf16.gmra.mxu0 %v680
        %v719 = vpop.f32.mrf.mxu0
        %v720 = vadd.f32 0.0, %v719
        %v721 = vpop.f32.mrf.mxu0
        %v722 = vpop.f32.mrf.mxu0
        %v723 = vpop.f32.mrf.mxu0
        %724 = vdwg.mxu0
        %v725 = vadd.f32 %v666, %v720
        %v726 = vld [vmem:[%s5] sm:$0xff]
        %728 = vset.pattern.permute.xlu0 0
        %729 = vperm.xlu0 %728, %v726
        %v730 = vpop.permute.xlu0 %729
        %v732 = vadd.f32 %v725, %v730
        %v733 = vmax.f32 %v732, 0.0
        %734 = vst [vmem:[%s294] sm:$0xff] %v733
        %s735 = sand.u32 %s184, 1
        %s736 = scalar_lea.sflag [#allocation5], %s735
        %s737 = sand.u32 %s184, 1
        %s738 = smul.addr %s737, 8
        %s739 = scalar_lea.vmem [#allocation4], %s738
        // Predicated region
        $region45: #{encoder_block_forward.1} parent=43 // pred_check
          %p740 = pneg %p194
        $region46: #{encoder_block_forward.1} parent=43 // pred_check_branch
          %742 = sbr.rel (%p740) target = $region48
        $region47: #{encoder_block_forward.1} parent=43 // pred_region
          %s744 = ssub.s32 128, 128
          %745 = vsyncadd %s736, %s744
          %s746 = sadd.s32 %s24, %s25
          %s747 = smul.addr %s746, 128
          %s748 = scalar_lea.hbm %s6, %s747
          %s750 = sshll.u32 %s739, 4
          %s751 = int_to_ptr.vmem [resolvable:$true] %s750
          %753 = dma.vmem_to_hbm [thread:$0]  %s751, 128, %s748, %s736
        $region48: #{encoder_block_forward.1} parent=43 // pred_fallthru
          _
      $region44: #{encoder_block_forward.1} parent=5 // pred_fallthru
        _
      %p754 = scmp.le.s32.totalorder 2, %s15
      // Predicated region
      $region49: #{encoder_block_forward.1} parent=5 // pred_check
        %p755 = pneg %p754
      $region50: #{encoder_block_forward.1} parent=5 // pred_check_branch
        %757 = sbr.rel (%p755) target = $region52
      $region51: #{encoder_block_forward.1} parent=5 // pred_region
        %s758 = ssub.s32 %s15, 2
        // Predicated region
        $region53: #{encoder_block_forward.1} parent=51 // pred_check
          %p759 = pneg %p200
        $region54: #{encoder_block_forward.1} parent=51 // pred_check_branch
          %761 = sbr.rel (%p759) target = $region56
        $region55: #{encoder_block_forward.1} parent=51 // pred_region
          %s762 = sand.u32 %s185, 1
          %s763 = scalar_lea.sflag [#allocation5], %s762
          %s764 = sand.u32 %s185, 1
          %s765 = smul.addr %s764, 8
          %s766 = scalar_lea.vmem [#allocation4], %s765
          %767 = dma.done %s763, 128
        $region56: #{encoder_block_forward.1} parent=51 // pred_fallthru
          _
      $region52: #{encoder_block_forward.1} parent=5 // pred_fallthru
        _
    $region6: #{encoder_block_forward.1} parent=1 // loop_footer
      %s19 = sadd.s32 1, %s15
    $region7: #{encoder_block_forward.1} parent=1 // loop_footer_branch
      %14 = sbr.rel target = $region3
    $region8: #{encoder_block_forward.1} parent=1 // loop_exit
      _
    %768 = vsyncpa [#allocation5], 1
    %s769 = scalar_lea.sflag [#allocation5], 1
    %770 = vsyncpa %s769, 1

</llo_original>
